<compile_context>
chip_gen: v5e
topology: v5e:2x2
jax: 0.10.0
libtpu: 0.0.40
codegen_flags: <defaults>
</compile_context>

<pallas_src>
import jax
import jax.numpy as jnp
from jax.experimental import pallas as pl
from jax.experimental.pallas import tpu as pltpu


NEG_SLOPE = 0.01  # LeakyReLU(negative_slope=0.01)


def _leaky(v):
    return jnp.where(v >= 0, v, NEG_SLOPE * v)


def _round_up(n, m):
    return ((n + m - 1) // m) * m


def complete_module_kernel(x_ref, w1p_ref, b1p_ref, w2p_ref, b2p_ref,
                           wh_ref, bh_ref, wt_ref, bt_ref, y_ref):
    bf16 = jnp.bfloat16
    x = x_ref[...]                                            # (TB, in_total) bf16

    # subnet_pre: Linear -> LeakyReLU -> Linear -> LeakyReLU
    h = _leaky(jnp.dot(x, w1p_ref[...],
                       preferred_element_type=jnp.float32) + b1p_ref[...])
    pre = _leaky(jnp.dot(h.astype(bf16), w2p_ref[...],
                         preferred_element_type=jnp.float32) + b2p_ref[...])

    # fused first layer of subnet_out + subnet_mem (weights concatenated on lanes)
    hid = _leaky(jnp.dot(pre.astype(bf16), wh_ref[...],
                         preferred_element_type=jnp.float32) + bh_ref[...])

    # fused second layer (block-diagonal weights) -> one lane-dense (TB, out+mem) slab.
    # Output-layer activation is applied (default configuration is not
    # 'no_activation_function_on_output_layer').
    y = _leaky(jnp.dot(hid.astype(bf16), wt_ref[...],
                       preferred_element_type=jnp.float32) + bt_ref[...])

    y_ref[...] = y.astype(y_ref.dtype)


def prepare_params(params, output_size, memory_size):
    """One-time param prep (zero per-step cost): fuse the out/mem branches and
    cast weights to bf16.

    params: [w1p,b1p,w2p,b2p,w1o,b1o,w2o,b2o,w1m,b1m,w2m,b2m] with weights
    already transposed to (in, out) and biases shaped (1, out), all f32.
    """
    (w1p, b1p, w2p, b2p, w1o, b1o, w2o, b2o, w1m, b1m, w2m, b2m) = params
    hidden = w2p.shape[1]
    bf16 = jnp.bfloat16

    # first layers of both branches: concat along the output (lane) axis
    wh = jnp.concatenate([w1o, w1m], axis=1)                  # (hidden, 2*hidden)
    bh = jnp.concatenate([b1o, b1m], axis=1)                  # (1, 2*hidden)

    # second layers: block-diagonal -> single (2*hidden, out+mem) matmul
    wt = jnp.concatenate([
        jnp.concatenate([w2o, jnp.zeros((hidden, memory_size), w2o.dtype)], axis=1),
        jnp.concatenate([jnp.zeros((hidden, output_size), w2m.dtype), w2m], axis=1),
    ], axis=0)                                                # (2*hidden, out+mem)
    bt = jnp.concatenate([b2o, b2m], axis=1)                  # (1, out+mem)

    return (w1p.astype(bf16), b1p, w2p.astype(bf16), b2p,
            wh.astype(bf16), bh, wt.astype(bf16), bt)


def complete_module_forward(x, prepped, output_size, memory_size):
    """x: (B, input_size + memory_size) f32. Returns (out, mem) in f32."""
    w1p, b1p, w2p, b2p, wh, bh, wt, bt = prepped
    B, in_total = x.shape
    hidden = w2p.shape[1]
    comb = output_size + memory_size

    # Batch-tiled grid: weights stay VMEM-resident, x / y tiles are pipelined.
    # TB chosen so (2 buffers x (x tile + y tile) + all weights) stays far
    # below the scoped VMEM limit on v5e/v6e/v7x.
    TB = 512 if B >= 512 else _round_up(B, 8)
    grid = (pl.cdiv(B, TB),)

    x_bf = x.astype(jnp.bfloat16)

    def resident(a):
        return pl.BlockSpec(a.shape, lambda i: (0, 0))

    flops = 2 * B * (in_total * hidden + hidden * hidden
                     + hidden * (2 * hidden) + (2 * hidden) * comb)
    param_bytes = sum(int(a.size) * a.dtype.itemsize for a in prepped)
    bytes_accessed = int(x_bf.size) * 2 + param_bytes + B * comb * 4

    y = pl.pallas_call(
        complete_module_kernel,
        out_shape=jax.ShapeDtypeStruct((B, comb), jnp.float32),
        grid=grid,
        in_specs=[pl.BlockSpec((TB, in_total), lambda i: (i, 0))]
                 + [resident(a) for a in prepped],
        out_specs=pl.BlockSpec((TB, comb), lambda i: (i, 0)),
        compiler_params=pltpu.CompilerParams(
            dimension_semantics=("parallel",)),
        cost_estimate=pl.CostEstimate(flops=flops, transcendentals=0,
                                      bytes_accessed=bytes_accessed),
    )(x_bf, *prepped)

    return y[:, :output_size], y[:, output_size:]


def _init_linear(key, in_dim, out_dim):
    """Deterministic init mimicking nn.Linear (uniform(-1/sqrt(in), 1/sqrt(in))).
    Returns weight already transposed to (in, out) and bias as (1, out)."""
    kw, kb = jax.random.split(key)
    bound = 1.0 / jnp.sqrt(jnp.float32(in_dim))
    w = jax.random.uniform(kw, (in_dim, out_dim), jnp.float32, -bound, bound)
    b = jax.random.uniform(kb, (1, out_dim), jnp.float32, -bound, bound)
    return w, b


def _reference_forward(x, params):
    (w1p, b1p, w2p, b2p, w1o, b1o, w2o, b2o, w1m, b1m, w2m, b2m) = params
    lk = lambda v: jnp.where(v >= 0, v, NEG_SLOPE * v)
    pre = lk(lk(x @ w1p + b1p) @ w2p + b2p)
    out = lk(lk(pre @ w1o + b1o) @ w2o + b2o)
    mem = lk(lk(pre @ w1m + b1m) @ w2m + b2m)
    return out, mem


if __name__ == "__main__":
    # CompleteModule(input_size, hidden_size, memory_size, output_size)
    input_size, hidden_size, memory_size, output_size = 16, 32, 8, 16

    root = jax.random.PRNGKey(0)
    keys = jax.random.split(root, 8)

    # subnet_pre: NeuralNet(input_size + memory_size, hidden, hidden)
    w1p, b1p = _init_linear(keys[0], input_size + memory_size, hidden_size)
    w2p, b2p = _init_linear(keys[1], hidden_size, hidden_size)
    # subnet_out: NeuralNet(hidden, hidden, output_size)
    w1o, b1o = _init_linear(keys[2], hidden_size, hidden_size)
    w2o, b2o = _init_linear(keys[3], hidden_size, output_size)
    # subnet_mem: NeuralNet(hidden, hidden, memory_size)
    w1m, b1m = _init_linear(keys[4], hidden_size, hidden_size)
    w2m, b2m = _init_linear(keys[5], hidden_size, memory_size)

    params = [w1p, b1p, w2p, b2p, w1o, b1o, w2o, b2o, w1m, b1m, w2m, b2m]
    prepped = prepare_params(params, output_size, memory_size)

    # small demo batch (single grid step) + a larger batch exercising the
    # pipelined / parallel batch grid (2 grid steps of 512 rows).
    x_small = jax.random.normal(keys[6], (8, input_size + memory_size), jnp.float32)
    x_big = jax.random.normal(keys[7], (1024, input_size + memory_size), jnp.float32)

    for x in (x_small, x_big):
        out, mem = jax.block_until_ready(
            complete_module_forward(x, prepped, output_size, memory_size))
        ref_out, ref_mem = _reference_forward(x, params)
        assert out.shape == (x.shape[0], output_size)
        assert mem.shape == (x.shape[0], memory_size)
        # bf16 MXU inputs with f32 accumulation -> loosened tolerance vs f32 ref
        assert jnp.allclose(out, ref_out, atol=3e-2, rtol=3e-2)
        assert jnp.allclose(mem, ref_mem, atol=3e-2, rtol=3e-2)

    print("KERNEL_OK")
</pallas_src>

<mosaic_0001>
module attributes {stable_mosaic.version = 11 : i64} {
  func.func @complete_module_kernel(%arg0: i32, %arg1: memref<8x24xbf16, #tpu.memory_space<vmem>>, %arg2: memref<24x32xbf16, #tpu.memory_space<vmem>>, %arg3: memref<1x32xf32, #tpu.memory_space<vmem>>, %arg4: memref<32x32xbf16, #tpu.memory_space<vmem>>, %arg5: memref<1x32xf32, #tpu.memory_space<vmem>>, %arg6: memref<32x64xbf16, #tpu.memory_space<vmem>>, %arg7: memref<1x64xf32, #tpu.memory_space<vmem>>, %arg8: memref<64x24xbf16, #tpu.memory_space<vmem>>, %arg9: memref<1x24xf32, #tpu.memory_space<vmem>>, %arg10: memref<8x24xf32, #tpu.memory_space<vmem>>) attributes {dimension_semantics = [#tpu.dimension_semantics<parallel>], iteration_bounds = array<i64: 1>, scalar_prefetch = 0 : i64, scratch_operands = 0 : i64, tpu.core_type = #tpu.core_type<tc>, window_params = [{transform_indices = @transform_0, window_bounds = array<i64: 8, 24>}, {pipeline_mode = #tpu.pipeline_mode<synchronous>, transform_indices = @transform_1, window_bounds = array<i64: 24, 32>}, {pipeline_mode = #tpu.pipeline_mode<synchronous>, transform_indices = @transform_2, window_bounds = array<i64: 1, 32>}, {pipeline_mode = #tpu.pipeline_mode<synchronous>, transform_indices = @transform_3, window_bounds = array<i64: 32, 32>}, {pipeline_mode = #tpu.pipeline_mode<synchronous>, transform_indices = @transform_4, window_bounds = array<i64: 1, 32>}, {pipeline_mode = #tpu.pipeline_mode<synchronous>, transform_indices = @transform_5, window_bounds = array<i64: 32, 64>}, {pipeline_mode = #tpu.pipeline_mode<synchronous>, transform_indices = @transform_6, window_bounds = array<i64: 1, 64>}, {pipeline_mode = #tpu.pipeline_mode<synchronous>, transform_indices = @transform_7, window_bounds = array<i64: 64, 24>}, {pipeline_mode = #tpu.pipeline_mode<synchronous>, transform_indices = @transform_8, window_bounds = array<i64: 1, 24>}, {transform_indices = @transform_9, window_bounds = array<i64: 8, 24>}]} {
    %c0 = arith.constant 0 : index
    %c0_0 = arith.constant 0 : index
    %0 = vector.load %arg1[%c0, %c0_0] : memref<8x24xbf16, #tpu.memory_space<vmem>>, vector<8x24xbf16>
    %c0_1 = arith.constant 0 : index
    %c0_2 = arith.constant 0 : index
    %1 = vector.load %arg2[%c0_1, %c0_2] : memref<24x32xbf16, #tpu.memory_space<vmem>>, vector<24x32xbf16>
    %cst = arith.constant dense<0.000000e+00> : vector<8x32xf32>
    %2 = tpu.matmul %0, %1, %cst {dimension_numbers = #tpu.dot_dimension_numbers<[1], [0], [0], [1], [0, 0, 1, 1], [], []>} : vector<8x24xbf16>, vector<24x32xbf16>, vector<8x32xf32> -> vector<8x32xf32>
    %c0_3 = arith.constant 0 : index
    %c0_4 = arith.constant 0 : index
    %3 = vector.load %arg3[%c0_3, %c0_4] : memref<1x32xf32, #tpu.memory_space<vmem>>, vector<1x32xf32>
    %4 = vector.broadcast %3 : vector<1x32xf32> to vector<8x32xf32>
    %5 = arith.addf %2, %4 : vector<8x32xf32>
    %cst_5 = arith.constant 0.000000e+00 : f32
    %6 = vector.broadcast %cst_5 : f32 to vector<8x32xf32>
    %7 = arith.cmpf oge, %5, %6 : vector<8x32xf32>
    %cst_6 = arith.constant 0.00999999977 : f32
    %8 = vector.broadcast %cst_6 : f32 to vector<8x32xf32>
    %9 = arith.mulf %8, %5 : vector<8x32xf32>
    %10 = arith.select %7, %5, %9 : vector<8x32xi1>, vector<8x32xf32>
    %11 = arith.truncf %10 : vector<8x32xf32> to vector<8x32xbf16>
    %c0_7 = arith.constant 0 : index
    %c0_8 = arith.constant 0 : index
    %12 = vector.load %arg4[%c0_7, %c0_8] : memref<32x32xbf16, #tpu.memory_space<vmem>>, vector<32x32xbf16>
    %cst_9 = arith.constant dense<0.000000e+00> : vector<8x32xf32>
    %13 = tpu.matmul %11, %12, %cst_9 {dimension_numbers = #tpu.dot_dimension_numbers<[1], [0], [0], [1], [0, 0, 1, 1], [], []>} : vector<8x32xbf16>, vector<32x32xbf16>, vector<8x32xf32> -> vector<8x32xf32>
    %c0_10 = arith.constant 0 : index
    %c0_11 = arith.constant 0 : index
    %14 = vector.load %arg5[%c0_10, %c0_11] : memref<1x32xf32, #tpu.memory_space<vmem>>, vector<1x32xf32>
    %15 = vector.broadcast %14 : vector<1x32xf32> to vector<8x32xf32>
    %16 = arith.addf %13, %15 : vector<8x32xf32>
    %cst_12 = arith.constant 0.000000e+00 : f32
    %17 = vector.broadcast %cst_12 : f32 to vector<8x32xf32>
    %18 = arith.cmpf oge, %16, %17 : vector<8x32xf32>
    %cst_13 = arith.constant 0.00999999977 : f32
    %19 = vector.broadcast %cst_13 : f32 to vector<8x32xf32>
    %20 = arith.mulf %19, %16 : vector<8x32xf32>
    %21 = arith.select %18, %16, %20 : vector<8x32xi1>, vector<8x32xf32>
    %22 = arith.truncf %21 : vector<8x32xf32> to vector<8x32xbf16>
    %c0_14 = arith.constant 0 : index
    %c0_15 = arith.constant 0 : index
    %23 = vector.load %arg6[%c0_14, %c0_15] : memref<32x64xbf16, #tpu.memory_space<vmem>>, vector<32x64xbf16>
    %cst_16 = arith.constant dense<0.000000e+00> : vector<8x64xf32>
    %24 = tpu.matmul %22, %23, %cst_16 {dimension_numbers = #tpu.dot_dimension_numbers<[1], [0], [0], [1], [0, 0, 1, 1], [], []>} : vector<8x32xbf16>, vector<32x64xbf16>, vector<8x64xf32> -> vector<8x64xf32>
    %c0_17 = arith.constant 0 : index
    %c0_18 = arith.constant 0 : index
    %25 = vector.load %arg7[%c0_17, %c0_18] : memref<1x64xf32, #tpu.memory_space<vmem>>, vector<1x64xf32>
    %26 = vector.broadcast %25 : vector<1x64xf32> to vector<8x64xf32>
    %27 = arith.addf %24, %26 : vector<8x64xf32>
    %cst_19 = arith.constant 0.000000e+00 : f32
    %28 = vector.broadcast %cst_19 : f32 to vector<8x64xf32>
    %29 = arith.cmpf oge, %27, %28 : vector<8x64xf32>
    %cst_20 = arith.constant 0.00999999977 : f32
    %30 = vector.broadcast %cst_20 : f32 to vector<8x64xf32>
    %31 = arith.mulf %30, %27 : vector<8x64xf32>
    %32 = arith.select %29, %27, %31 : vector<8x64xi1>, vector<8x64xf32>
    %33 = arith.truncf %32 : vector<8x64xf32> to vector<8x64xbf16>
    %c0_21 = arith.constant 0 : index
    %c0_22 = arith.constant 0 : index
    %34 = vector.load %arg8[%c0_21, %c0_22] : memref<64x24xbf16, #tpu.memory_space<vmem>>, vector<64x24xbf16>
    %cst_23 = arith.constant dense<0.000000e+00> : vector<8x24xf32>
    %35 = tpu.matmul %33, %34, %cst_23 {dimension_numbers = #tpu.dot_dimension_numbers<[1], [0], [0], [1], [0, 0, 1, 1], [], []>} : vector<8x64xbf16>, vector<64x24xbf16>, vector<8x24xf32> -> vector<8x24xf32>
    %c0_24 = arith.constant 0 : index
    %c0_25 = arith.constant 0 : index
    %36 = vector.load %arg9[%c0_24, %c0_25] : memref<1x24xf32, #tpu.memory_space<vmem>>, vector<1x24xf32>
    %37 = vector.broadcast %36 : vector<1x24xf32> to vector<8x24xf32>
    %38 = arith.addf %35, %37 : vector<8x24xf32>
    %cst_26 = arith.constant 0.000000e+00 : f32
    %39 = vector.broadcast %cst_26 : f32 to vector<8x24xf32>
    %40 = arith.cmpf oge, %38, %39 : vector<8x24xf32>
    %cst_27 = arith.constant 0.00999999977 : f32
    %41 = vector.broadcast %cst_27 : f32 to vector<8x24xf32>
    %42 = arith.mulf %41, %38 : vector<8x24xf32>
    %43 = arith.select %40, %38, %42 : vector<8x24xi1>, vector<8x24xf32>
    %c0_28 = arith.constant 0 : index
    %c0_29 = arith.constant 0 : index
    %44 = vector.load %arg10[%c0_28, %c0_29] : memref<8x24xf32, #tpu.memory_space<vmem>>, vector<8x24xf32>
    tpu.vector_store %arg10[%c0_28, %c0_29], %43 {strides = array<i32>} : memref<8x24xf32, #tpu.memory_space<vmem>>, vector<8x24xf32>,
    return
  }
  func.func @transform_0(%arg0: i32) -> (i32, i32) {
    %c0_i32 = arith.constant 0 : i32
    %c0_i32_0 = arith.constant 0 : i32
    return %arg0, %c0_i32 : i32, i32
  }
  func.func @transform_1(%arg0: i32) -> (i32, i32) {
    %c0_i32 = arith.constant 0 : i32
    %c0_i32_0 = arith.constant 0 : i32
    %c0_i32_1 = arith.constant 0 : i32
    return %c0_i32, %c0_i32_0 : i32, i32
  }
  func.func @transform_2(%arg0: i32) -> (i32, i32) {
    %c0_i32 = arith.constant 0 : i32
    %c0_i32_0 = arith.constant 0 : i32
    %c0_i32_1 = arith.constant 0 : i32
    return %c0_i32, %c0_i32_0 : i32, i32
  }
  func.func @transform_3(%arg0: i32) -> (i32, i32) {
    %c0_i32 = arith.constant 0 : i32
    %c0_i32_0 = arith.constant 0 : i32
    %c0_i32_1 = arith.constant 0 : i32
    return %c0_i32, %c0_i32_0 : i32, i32
  }
  func.func @transform_4(%arg0: i32) -> (i32, i32) {
    %c0_i32 = arith.constant 0 : i32
    %c0_i32_0 = arith.constant 0 : i32
    %c0_i32_1 = arith.constant 0 : i32
    return %c0_i32, %c0_i32_0 : i32, i32
  }
  func.func @transform_5(%arg0: i32) -> (i32, i32) {
    %c0_i32 = arith.constant 0 : i32
    %c0_i32_0 = arith.constant 0 : i32
    %c0_i32_1 = arith.constant 0 : i32
    return %c0_i32, %c0_i32_0 : i32, i32
  }
  func.func @transform_6(%arg0: i32) -> (i32, i32) {
    %c0_i32 = arith.constant 0 : i32
    %c0_i32_0 = arith.constant 0 : i32
    %c0_i32_1 = arith.constant 0 : i32
    return %c0_i32, %c0_i32_0 : i32, i32
  }
  func.func @transform_7(%arg0: i32) -> (i32, i32) {
    %c0_i32 = arith.constant 0 : i32
    %c0_i32_0 = arith.constant 0 : i32
    %c0_i32_1 = arith.constant 0 : i32
    return %c0_i32, %c0_i32_0 : i32, i32
  }
  func.func @transform_8(%arg0: i32) -> (i32, i32) {
    %c0_i32 = arith.constant 0 : i32
    %c0_i32_0 = arith.constant 0 : i32
    %c0_i32_1 = arith.constant 0 : i32
    return %c0_i32, %c0_i32_0 : i32, i32
  }
  func.func @transform_9(%arg0: i32) -> (i32, i32) {
    %c0_i32 = arith.constant 0 : i32
    %c0_i32_0 = arith.constant 0 : i32
    return %arg0, %c0_i32 : i32, i32
  }
}

</mosaic_0001>

<llo_original>
// kernel: tpu_custom_call.1
$region0: #{tpu_custom_call.1}
  #allocation0 [shape = 'u32[]', space=smem, size = 0x4, offset = 0x4, fixed_abs, tag = 'smem constant byte address 0x4 - core index']
  #allocation1 [shape = 'u32[72,128]{1,0:T(1,128)}', space=vmem, size = 0x9000, scoped, tag = 'internal scratch']
  %s0 = inlined_call_operand.hbm [shape: bf16[8,24], index: 0, kind: input, shape index: {}]
  %s1 = inlined_call_operand.vmem [shape: bf16[24,32], index: 1, kind: input, shape index: {}]
  %s2 = inlined_call_operand.vmem [shape: f32[1,32], index: 2, kind: input, shape index: {}]
  %s3 = inlined_call_operand.vmem [shape: bf16[32,32], index: 3, kind: input, shape index: {}]
  %s4 = inlined_call_operand.vmem [shape: f32[1,32], index: 4, kind: input, shape index: {}]
  %s5 = inlined_call_operand.vmem [shape: bf16[32,64], index: 5, kind: input, shape index: {}]
  %s6 = inlined_call_operand.vmem [shape: f32[1,64], index: 6, kind: input, shape index: {}]
  %s7 = inlined_call_operand.vmem [shape: bf16[64,24], index: 7, kind: input, shape index: {}]
  %s8 = inlined_call_operand.vmem [shape: f32[1,24], index: 8, kind: input, shape index: {}]
  %s9 = inlined_call_operand.hbm [shape: f32[8,24], index: 9, kind: output, shape index: {}]
  %s10 = sld [smem:[#allocation0]]
  $region50: #{tpu_custom_call.1} parent=0
    _
  %s12 = ssub.s32 1, %s10
  %s13 = scalar_select 0, %s12, %s10
  $region1: #{tpu_custom_call.1} parent=0
    #allocation2 [shape = 'u8[2048]{0}', space=vmem, size = 0x800, scoped, tag = 'input window, operand 0, single buffered']
    #allocation3 [shape = 's32[1]{0}', space=sflag, size = 0x4, scoped, tag = 'scoped memory for tpu_custom_call.1']
    #allocation4 [shape = 's32[1]{0}', space=sflag, size = 0x4, scoped, tag = 'scoped memory for tpu_custom_call.1']
    #allocation5 [shape = 'u8[4096]{0}', space=vmem, size = 0x1000, scoped, tag = 'output window, operand 0, single buffered']
    %14 = vsyncpa [#allocation3], 0
    %15 = vsyncpa [#allocation4], 0
    // Predicated region
    $region2: #{tpu_custom_call.1} parent=1 // pred_check
      _
    $region3: #{tpu_custom_call.1} parent=1 // pred_check_branch
      %17 = sbr.rel (0) target = $region5
    $region4: #{tpu_custom_call.1} parent=1 // pred_region
      %19 = vsyncadd [#allocation3], 0
      %s21 = sshll.u32 %s0, 4
      %s22 = int_to_ptr.hbm [resolvable:$true] %s21
      %s23 = sshll.u32 [#allocation2], 4
      %s24 = int_to_ptr.vmem [resolvable:$true] %s23
      %26 = dma.hbm_to_vmem [thread:$0]  %s22, 64, %s24, [#allocation3]
    $region5: #{tpu_custom_call.1} parent=1 // pred_fallthru
      _
    // Predicated region
    $region6: #{tpu_custom_call.1} parent=1 // pred_check
      _
    $region7: #{tpu_custom_call.1} parent=1 // pred_check_branch
      %28 = sbr.rel (0) target = $region9
    $region8: #{tpu_custom_call.1} parent=1 // pred_region
      _
    $region9: #{tpu_custom_call.1} parent=1 // pred_fallthru
      _
    // Predicated region
    $region10: #{tpu_custom_call.1} parent=1 // pred_check
      _
    $region11: #{tpu_custom_call.1} parent=1 // pred_check_branch
      %30 = sbr.rel (0) target = $region13
    $region12: #{tpu_custom_call.1} parent=1 // pred_region
      _
    $region13: #{tpu_custom_call.1} parent=1 // pred_fallthru
      _
    // Predicated region
    $region14: #{tpu_custom_call.1} parent=1 // pred_check
      _
    $region15: #{tpu_custom_call.1} parent=1 // pred_check_branch
      %32 = sbr.rel (0) target = $region17
    $region16: #{tpu_custom_call.1} parent=1 // pred_region
      _
    $region17: #{tpu_custom_call.1} parent=1 // pred_fallthru
      _
    // Predicated region
    $region18: #{tpu_custom_call.1} parent=1 // pred_check
      _
    $region19: #{tpu_custom_call.1} parent=1 // pred_check_branch
      %34 = sbr.rel (0) target = $region21
    $region20: #{tpu_custom_call.1} parent=1 // pred_region
      _
    $region21: #{tpu_custom_call.1} parent=1 // pred_fallthru
      _
    // Predicated region
    $region22: #{tpu_custom_call.1} parent=1 // pred_check
      _
    $region23: #{tpu_custom_call.1} parent=1 // pred_check_branch
      %36 = sbr.rel (0) target = $region25
    $region24: #{tpu_custom_call.1} parent=1 // pred_region
      _
    $region25: #{tpu_custom_call.1} parent=1 // pred_fallthru
      _
    // Predicated region
    $region26: #{tpu_custom_call.1} parent=1 // pred_check
      _
    $region27: #{tpu_custom_call.1} parent=1 // pred_check_branch
      %38 = sbr.rel (0) target = $region29
    $region28: #{tpu_custom_call.1} parent=1 // pred_region
      _
    $region29: #{tpu_custom_call.1} parent=1 // pred_fallthru
      _
    // Predicated region
    $region30: #{tpu_custom_call.1} parent=1 // pred_check
      _
    $region31: #{tpu_custom_call.1} parent=1 // pred_check_branch
      %40 = sbr.rel (0) target = $region33
    $region32: #{tpu_custom_call.1} parent=1 // pred_region
      _
    $region33: #{tpu_custom_call.1} parent=1 // pred_fallthru
      _
    // Predicated region
    $region34: #{tpu_custom_call.1} parent=1 // pred_check
      _
    $region35: #{tpu_custom_call.1} parent=1 // pred_check_branch
      %42 = sbr.rel (0) target = $region37
    $region36: #{tpu_custom_call.1} parent=1 // pred_region
      _
    $region37: #{tpu_custom_call.1} parent=1 // pred_fallthru
      _
    // Predicated region
    $region38: #{tpu_custom_call.1} parent=1 // pred_check
      _
    $region39: #{tpu_custom_call.1} parent=1 // pred_check_branch
      %44 = sbr.rel (0) target = $region41
    $region40: #{tpu_custom_call.1} parent=1 // pred_region
      %46 = dma.done [#allocation3], 64
    $region41: #{tpu_custom_call.1} parent=1 // pred_fallthru
      _
    %v48 = vld [vmem:[#allocation2] sm:$0xf]
    %v49 = vld [vmem:[%s1] sm:$0xf]
    %v50 = vld [vmem:[%s1 + $0x4] sm:$0xf]
    %v51 = vld [vmem:[%s1 + $0x8] sm:$0xf]
    %v52 = vld [vmem:[%s2] sm:$0x1]
    %v54 = vperm.slane %v52, 0
    %v59 = vunpack.c.l.b16 %v49
    %v60 = vunpack.c.l.b16 %v50
    %v61 = vunpack.c.l.b16 %v51
    %v62 = vpack.c.b16 %v60, %v59
    %v63 = vpack.c.b16 %v61, %v61
    %vm65 = vcmask 195584
    %v67 = vsel %vm65, %v48, 0
    %vm69 = vcmask 1043456
    %v71 = vsel %vm69, %v63, 0
    %73 = vmatpush.bf16.msra.mxu0 0
    %74 = vmatpush.bf16.msra.mxu0 0
    %75 = vmatpush.bf16.msra.mxu0 0
    %76 = vmatpush.bf16.msra.mxu0 0
    %77 = vmatpush.bf16.msra.mxu0 0
    %78 = vmatpush.bf16.msra.mxu0 0
    %79 = vmatpush.bf16.msra.mxu0 %v71
    %80 = vmatpush.bf16.msra.mxu0 %v62
    %81 = vmatmul.bf16.gmra.mxu0 %v67
    %v82 = vpop.f32.mrf.mxu0
    %v83 = vadd.f32 %v54, %v82
    %v84 = vpop.f32.mrf.mxu0
    %85 = vdwg.mxu0
    %vm86 = vcmp.ge.f32.partialorder %v83, 0.0
    %v87 = vmul.f32 %v83, 0.01
    %v88 = vsel %vm86, %v83, %v87
    %v89 = vpack.c.bf16 %v88, %v88
    %v90 = vld [vmem:[%s3] sm:$0xf]
    %v91 = vld [vmem:[%s3 + $0x4] sm:$0xf]
    %v92 = vld [vmem:[%s3 + $0x8] sm:$0xf]
    %v93 = vld [vmem:[%s3 + $0xc] sm:$0xf]
    %v94 = vld [vmem:[%s4] sm:$0x1]
    %v96 = vperm.slane %v94, 0
    %v102 = vunpack.c.l.b16 %v90
    %v103 = vunpack.c.l.b16 %v91
    %v104 = vunpack.c.l.b16 %v92
    %v105 = vunpack.c.l.b16 %v93
    %v106 = vpack.c.b16 %v103, %v102
    %v107 = vpack.c.b16 %v105, %v104
    %vm110 = vcmask 261120
    %v112 = vsel %vm110, %v89, 0
    %114 = vmatpush.bf16.msra.mxu0 0
    %115 = vmatpush.bf16.msra.mxu0 0
    %116 = vmatpush.bf16.msra.mxu0 0
    %117 = vmatpush.bf16.msra.mxu0 0
    %118 = vmatpush.bf16.msra.mxu0 0
    %119 = vmatpush.bf16.msra.mxu0 0
    %120 = vmatpush.bf16.msra.mxu0 %v107
    %121 = vmatpush.bf16.msra.mxu0 %v106
    %122 = vmatmul.bf16.gmra.mxu0 %v112
    %v123 = vpop.f32.mrf.mxu0
    %v124 = vadd.f32 %v96, %v123
    %v125 = vpop.f32.mrf.mxu0
    %126 = vdwg.mxu0
    %vm127 = vcmp.ge.f32.partialorder %v124, 0.0
    %v128 = vmul.f32 %v124, 0.01
    %v129 = vsel %vm127, %v124, %v128
    %v130 = vpack.c.bf16 %v129, %v129
    %v131 = vld [vmem:[%s5] sm:$0xf]
    %v132 = vld [vmem:[%s5 + $0x4] sm:$0xf]
    %v133 = vld [vmem:[%s5 + $0x8] sm:$0xf]
    %v134 = vld [vmem:[%s5 + $0xc] sm:$0xf]
    %v135 = vld [vmem:[%s6] sm:$0x1]
    %v137 = vperm.slane %v135, 0
    %v143 = vunpack.c.l.b16 %v131
    %v144 = vunpack.c.l.b16 %v132
    %v145 = vunpack.c.l.b16 %v133
    %v146 = vunpack.c.l.b16 %v134
    %v147 = vpack.c.b16 %v144, %v143
    %v148 = vpack.c.b16 %v146, %v145
    %v152 = vsel %vm110, %v130, 0
    %154 = vmatpush.bf16.msra.mxu0 0
    %155 = vmatpush.bf16.msra.mxu0 0
    %156 = vmatpush.bf16.msra.mxu0 0
    %157 = vmatpush.bf16.msra.mxu0 0
    %158 = vmatpush.bf16.msra.mxu0 0
    %159 = vmatpush.bf16.msra.mxu0 0
    %160 = vmatpush.bf16.msra.mxu0 %v148
    %161 = vmatpush.bf16.msra.mxu0 %v147
    %162 = vmatmul.bf16.gmra.mxu0 %v152
    %v163 = vpop.f32.mrf.mxu0
    %v164 = vadd.f32 %v137, %v163
    %v165 = vpop.f32.mrf.mxu0
    %166 = vdwg.mxu0
    %vm167 = vcmp.ge.f32.partialorder %v164, 0.0
    %v168 = vmul.f32 %v164, 0.01
    %v169 = vsel %vm167, %v164, %v168
    %v170 = vpack.c.bf16 %v169, %v169
    %v171 = vld [vmem:[%s7] sm:$0xf]
    %v172 = vld [vmem:[%s7 + $0x4] sm:$0xf]
    %v173 = vld [vmem:[%s7 + $0x8] sm:$0xf]
    %v174 = vld [vmem:[%s7 + $0xc] sm:$0xf]
    %v175 = vld [vmem:[%s7 + $0x10] sm:$0xf]
    %v176 = vld [vmem:[%s7 + $0x14] sm:$0xf]
    %v177 = vld [vmem:[%s7 + $0x18] sm:$0xf]
    %v178 = vld [vmem:[%s7 + $0x1c] sm:$0xf]
    %v179 = vld [vmem:[%s8] sm:$0x1]
    %v181 = vperm.slane %v179, 0
    %v191 = vunpack.c.l.b16 %v171
    %v192 = vunpack.c.l.b16 %v172
    %v193 = vunpack.c.l.b16 %v173
    %v194 = vunpack.c.l.b16 %v174
    %v195 = vunpack.c.l.b16 %v175
    %v196 = vunpack.c.l.b16 %v176
    %v197 = vunpack.c.l.b16 %v177
    %v198 = vunpack.c.l.b16 %v178
    %v199 = vpack.c.b16 %v192, %v191
    %v200 = vpack.c.b16 %v194, %v193
    %v201 = vpack.c.b16 %v196, %v195
    %v202 = vpack.c.b16 %v198, %v197
    %vm207 = vcmask 523264
    %v209 = vsel %vm207, %v170, 0
    %211 = vmatpush.bf16.msra.mxu0 0
    %212 = vmatpush.bf16.msra.mxu0 0
    %213 = vmatpush.bf16.msra.mxu0 0
    %214 = vmatpush.bf16.msra.mxu0 0
    %215 = vmatpush.bf16.msra.mxu0 %v202
    %216 = vmatpush.bf16.msra.mxu0 %v201
    %217 = vmatpush.bf16.msra.mxu0 %v200
    %218 = vmatpush.bf16.msra.mxu0 %v199
    %219 = vmatmul.bf16.gmra.mxu0 %v209
    %v220 = vpop.f32.mrf.mxu0
    %v221 = vadd.f32 %v181, %v220
    %v222 = vpop.f32.mrf.mxu0
    %223 = vdwg.mxu0
    %vm224 = vcmp.ge.f32.partialorder %v221, 0.0
    %v225 = vmul.f32 %v221, 0.01
    %v226 = vsel %vm224, %v221, %v225
    %227 = vst.msk [vmem:[#allocation5] sm:$0xff] %vm65, %v226
    // Predicated region
    $region42: #{tpu_custom_call.1} parent=1 // pred_check
      _
    $region43: #{tpu_custom_call.1} parent=1 // pred_check_branch
      %229 = sbr.rel (0) target = $region45
    $region44: #{tpu_custom_call.1} parent=1 // pred_region
      %231 = vsyncadd [#allocation4], 0
      %s233 = sshll.u32 [#allocation5], 4
      %s234 = int_to_ptr.vmem [resolvable:$true] %s233
      %s235 = sshll.u32 %s9, 4
      %s236 = int_to_ptr.hbm [resolvable:$true] %s235
      %238 = dma.vmem_to_hbm [thread:$0]  %s234, 128, %s236, [#allocation4]
    $region45: #{tpu_custom_call.1} parent=1 // pred_fallthru
      _
    // Predicated region
    $region46: #{tpu_custom_call.1} parent=1 // pred_check
      _
    $region47: #{tpu_custom_call.1} parent=1 // pred_check_branch
      %240 = sbr.rel (0) target = $region49
    $region48: #{tpu_custom_call.1} parent=1 // pred_region
      %242 = dma.done [#allocation4], 128
    $region49: #{tpu_custom_call.1} parent=1 // pred_fallthru
      _
    %243 = vsyncpa [#allocation3], 1
    %244 = vsyncpa [#allocation4], 1

</llo_original>
